<compile_context>
chip_gen: v6e
topology: v6e:2x2x1
jax: 0.10.0
libtpu: 0.0.40
codegen_flags: <defaults>
</compile_context>

<pallas_src>
import jax
import jax.numpy as jnp
from jax import lax
from jax.experimental import pallas as pl
from jax.experimental.pallas import tpu as pltpu


def _cov_kernel(xcol_ref, wbd_ref, b_ref, gram_ref):
    # xcol_ref: (N*C_in*K, T_out)   im2col input, batches stacked on the sublane axis
    # wbd_ref:  (N*C_out, N*C_in*K) block-diagonal conv weights (taps folded into K)
    # b_ref:    (T_out, T_out)      B = A/sum(A) - w_n w_n^T
    # gram_ref: (N*C_out, N*C_out)  full Gram; diagonal (C_out, C_out) blocks = result
    r = jnp.dot(wbd_ref[...], xcol_ref[...],
                preferred_element_type=jnp.float32)          # (N*C_out, T_out)
    rb = jnp.dot(r, b_ref[...],
                 preferred_element_type=jnp.float32)         # (N*C_out, T_out)
    # (R B) R^T: contract the T_out axes once for all batches (single transposed-RHS
    # contraction instead of N per-batch ones).
    gram = lax.dot_general(rb, r, (((1,), (1,)), ((), ())),
                           preferred_element_type=jnp.float32)
    gram_ref[...] = gram.astype(gram_ref.dtype)              # one consolidated store


def covariance_forward(x, kernel, A, w):
    """Pallas equivalent of Covariance.forward.

    x: (N, C_in, T) f32; kernel: (C_out, C_in, K) f32;
    A: (T_out, T_out) f32; w: (T_out, 1) f32, with T_out = T - (K - 1).
    Returns (N, C_out, C_out) f32.
    """
    N, C_in, T = x.shape
    C_out, C_in_w, K = kernel.shape
    assert C_in == C_in_w
    T_out = T - (K - 1)
    assert A.shape == (T_out, T_out)
    assert w.shape == (T_out, 1)

    # ---- wrapper-side layout prep (plain XLA, cheap at these sizes) ----
    # im2col with batches stacked on the sublane axis:
    #   xcol[n*C_in*K + c*K + j, t] = x[n, c, t + j]
    taps = jnp.stack([x[:, :, j:j + T_out] for j in range(K)], axis=2)  # (N, C_in, K, T_out)
    xcol = taps.reshape(N * C_in * K, T_out)

    # Block-diagonal conv weights: row (n, o) only contracts against batch n's rows.
    w2 = kernel.reshape(C_out, C_in * K)                                # (C_out, C_in*K)
    eye_n = jnp.eye(N, dtype=x.dtype)
    w_bd = (eye_n[:, None, :, None] * w2[None, :, None, :]).reshape(
        N * C_out, N * C_in * K)

    # Fold Quadratic + Barycenter into one quadratic form (elementwise outer product,
    # no MXU / precision issues in the wrapper).
    w_n = w / jnp.sum(w)                                                # (T_out, 1)
    b = A / jnp.sum(A) - w_n * jnp.transpose(w_n)                       # (T_out, T_out)

    gram = pl.pallas_call(
        _cov_kernel,
        out_shape=jax.ShapeDtypeStruct((N * C_out, N * C_out), x.dtype),
        in_specs=[
            pl.BlockSpec(memory_space=pltpu.MemorySpace.VMEM),
            pl.BlockSpec(memory_space=pltpu.MemorySpace.VMEM),
            pl.BlockSpec(memory_space=pltpu.MemorySpace.VMEM),
        ],
        out_specs=pl.BlockSpec(memory_space=pltpu.MemorySpace.VMEM),
    )(xcol, w_bd, b)

    # Extract the N diagonal (C_out, C_out) blocks; the cross-batch blocks were free
    # MXU padding and are discarded here.
    idx = jnp.arange(N)
    return gram.reshape(N, C_out, N, C_out)[idx, :, idx, :]


def make_covariance_params(input_shape, k=2, channels=None, eps=1e-4, seed=0):
    """Deterministic re-implementation of Covariance.__init__ parameter setup."""
    assert k >= 2, "Differential filter [..., -1, 1] requires k >= 2"
    n, m = input_shape
    out_channel = n if channels is None else channels
    t_out = m - (k - 1)
    key_kernel, key_a = jax.random.split(jax.random.PRNGKey(seed))

    # Differential kernel: per-channel [0, ..., -1, 1] filter + eps noise.
    filt = jnp.zeros((k,), jnp.float32).at[-2].set(-1.0).at[-1].set(1.0)
    kernel = jnp.zeros((out_channel, n, k), jnp.float32)
    idx = jnp.arange(n)
    kernel = kernel.at[idx, idx, :].set(filt)
    kernel = kernel + eps * jax.random.normal(key_kernel, (out_channel, n, k), jnp.float32)

    # Quadratic A: identity + eps noise.  Barycenter weight: uniform 1/T_out.
    A = jnp.eye(t_out, dtype=jnp.float32) + eps * jax.random.normal(
        key_a, (t_out, t_out), jnp.float32)
    w = jnp.ones((t_out, 1), jnp.float32) / t_out
    return kernel, A, w


def covariance_reference(x, kernel, A, w):
    """Unfused pure-JAX reference following the PyTorch module op-by-op."""
    N, C_in, T = x.shape
    C_out, _, K = kernel.shape
    T_out = T - (K - 1)
    ret = jnp.zeros((N, C_out, T_out), jnp.float32)
    for j in range(K):
        ret = ret + jnp.einsum("oc,nct->not", kernel[:, :, j], x[:, :, j:j + T_out],
                               precision="highest")
    squared = jnp.einsum("not,ts,nps->nop", ret, A, ret,
                         precision="highest") / jnp.sum(A)
    w_n = w / jnp.sum(w)
    mean = jnp.einsum("not,ts->nos", ret, w_n, precision="highest")   # (N, C_out, 1)
    return squared - mean * jnp.swapaxes(mean, 1, 2)


if __name__ == "__main__":
    # Matches the docstring example: Covariance((10, 20), k=3), batch_size = 3.
    batch_size = 3
    input_shape = (10, 20)
    k = 3

    x = jax.random.normal(jax.random.PRNGKey(0), (batch_size, *input_shape),
                          dtype=jnp.float32)

    cov_fn = jax.jit(covariance_forward)

    # 1) Module defaults (eps = 1e-4 noise on the conv kernel and on A).
    kernel, A, w = make_covariance_params(input_shape, k=k, eps=1e-4, seed=0)
    out = jax.block_until_ready(cov_fn(x, kernel, A, w))
    assert out.shape == (batch_size, input_shape[0], input_shape[0])
    ref = covariance_reference(x, kernel, A, w)
    err = float(jnp.abs(out - ref).max())
    assert err < 1e-3, err

    # 2) Spec sanity check (eps = 0): result equals the biased sample covariance of the
    #    k-step returns, as in the Covariance docstring (np.cov(ret, bias=True)).
    kernel0, A0, w0 = make_covariance_params(input_shape, k=k, eps=0.0, seed=0)
    out0 = jax.block_until_ready(cov_fn(x, kernel0, A0, w0))
    ret0 = x[:, :, 2:] - x[:, :, 1:-1]                  # filter [0, -1, 1]
    ret_c = ret0 - ret0.mean(axis=2, keepdims=True)
    cov0 = jnp.einsum("nct,ndt->ncd", ret_c, ret_c, precision="highest") / ret0.shape[2]
    err0 = float(jnp.abs(out0 - cov0).max())
    assert err0 < 1e-3, err0

    print("KERNEL_OK")
</pallas_src>

<mosaic_0001>
module attributes {stable_mosaic.version = 11 : i64} {
  func.func @_cov_kernel(%arg0: memref<90x18xf32, #tpu.memory_space<vmem>>, %arg1: memref<30x90xf32, #tpu.memory_space<vmem>>, %arg2: memref<18x18xf32, #tpu.memory_space<vmem>>, %arg3: memref<30x30xf32, #tpu.memory_space<vmem>>) attributes {dimension_semantics = [], scalar_prefetch = 0 : i64, scratch_operands = 0 : i64, tpu.core_type = #tpu.core_type<tc>} {
    %c0 = arith.constant 0 : index
    %c0_0 = arith.constant 0 : index
    %0 = vector.load %arg1[%c0, %c0_0] : memref<30x90xf32, #tpu.memory_space<vmem>>, vector<30x90xf32>
    %c0_1 = arith.constant 0 : index
    %c0_2 = arith.constant 0 : index
    %1 = vector.load %arg0[%c0_1, %c0_2] : memref<90x18xf32, #tpu.memory_space<vmem>>, vector<90x18xf32>
    %cst = arith.constant dense<0.000000e+00> : vector<30x18xf32>
    %2 = tpu.matmul %0, %1, %cst {dimension_numbers = #tpu.dot_dimension_numbers<[1], [0], [0], [1], [0, 0, 1, 1], [], []>} : vector<30x90xf32>, vector<90x18xf32>, vector<30x18xf32> -> vector<30x18xf32>
    %c0_3 = arith.constant 0 : index
    %c0_4 = arith.constant 0 : index
    %3 = vector.load %arg2[%c0_3, %c0_4] : memref<18x18xf32, #tpu.memory_space<vmem>>, vector<18x18xf32>
    %cst_5 = arith.constant dense<0.000000e+00> : vector<30x18xf32>
    %4 = tpu.matmul %2, %3, %cst_5 {dimension_numbers = #tpu.dot_dimension_numbers<[1], [0], [0], [1], [0, 0, 1, 1], [], []>} : vector<30x18xf32>, vector<18x18xf32>, vector<30x18xf32> -> vector<30x18xf32>
    %cst_6 = arith.constant dense<0.000000e+00> : vector<30x30xf32>
    %5 = tpu.matmul %4, %2, %cst_6 {dimension_numbers = #tpu.dot_dimension_numbers<[1], [1], [0], [0], [0, 0, 1, 0], [], []>} : vector<30x18xf32>, vector<30x18xf32>, vector<30x30xf32> -> vector<30x30xf32>
    %c0_7 = arith.constant 0 : index
    %c0_8 = arith.constant 0 : index
    %6 = vector.load %arg3[%c0_7, %c0_8] : memref<30x30xf32, #tpu.memory_space<vmem>>, vector<30x30xf32>
    tpu.vector_store %arg3[%c0_7, %c0_8], %5 {strides = array<i32>} : memref<30x30xf32, #tpu.memory_space<vmem>>, vector<30x30xf32>,
    return
  }
}

</mosaic_0001>

<llo_original>
// kernel: mul.18
$region0: #{mul.18}
  %s0 = inlined_call_operand.vmem [shape: f32[10,10,3], index: 0, kind: input, shape index: {}]
  %s1 = inlined_call_operand.vmem [shape: f32[10,30], index: 1, kind: output, shape index: {}]
  $region1: #{mul.18} parent=0
    #allocation0 [shape = 'u8[40960]{0}', space=vmem, size = 0xa000, scoped, tag = 'scoped mem for input reshape']
    %s3 = sshll.u32 1, 4
    %s4 = ssub.s32 %s3, 1
    %s5 = smul.addr 4, 9
    %s6 = scalar_lea.vmem %s0, %s5
    %v7 = vld [vmem:[%s6] sm:%s4]
    %s8 = scalar_lea.vmem [#allocation0], 72
    %9 = vst [vmem:[%s8] sm:%s4] %v7
    %s10 = smul.addr 4, 8
    %s11 = scalar_lea.vmem %s0, %s10
    %v12 = vld [vmem:[%s11] sm:%s4]
    %s13 = scalar_lea.vmem [#allocation0], 64
    %14 = vst [vmem:[%s13] sm:%s4] %v12
    %s15 = smul.addr 4, 7
    %s16 = scalar_lea.vmem %s0, %s15
    %v17 = vld [vmem:[%s16] sm:%s4]
    %s18 = scalar_lea.vmem [#allocation0], 56
    %19 = vst [vmem:[%s18] sm:%s4] %v17
    %s20 = smul.addr 4, 6
    %s21 = scalar_lea.vmem %s0, %s20
    %v22 = vld [vmem:[%s21] sm:%s4]
    %s23 = scalar_lea.vmem [#allocation0], 48
    %24 = vst [vmem:[%s23] sm:%s4] %v22
    %s25 = smul.addr 4, 5
    %s26 = scalar_lea.vmem %s0, %s25
    %v27 = vld [vmem:[%s26] sm:%s4]
    %s28 = scalar_lea.vmem [#allocation0], 40
    %29 = vst [vmem:[%s28] sm:%s4] %v27
    %s30 = smul.addr 4, 4
    %s31 = scalar_lea.vmem %s0, %s30
    %v32 = vld [vmem:[%s31] sm:%s4]
    %s33 = scalar_lea.vmem [#allocation0], 32
    %34 = vst [vmem:[%s33] sm:%s4] %v32
    %s35 = smul.addr 4, 3
    %s36 = scalar_lea.vmem %s0, %s35
    %v37 = vld [vmem:[%s36] sm:%s4]
    %s38 = scalar_lea.vmem [#allocation0], 24
    %39 = vst [vmem:[%s38] sm:%s4] %v37
    %s40 = smul.addr 4, 2
    %s41 = scalar_lea.vmem %s0, %s40
    %v42 = vld [vmem:[%s41] sm:%s4]
    %s43 = scalar_lea.vmem [#allocation0], 16
    %44 = vst [vmem:[%s43] sm:%s4] %v42
    %s45 = scalar_lea.vmem %s0, 4
    %v46 = vld [vmem:[%s45] sm:%s4]
    %s47 = scalar_lea.vmem [#allocation0], 8
    %48 = vst [vmem:[%s47] sm:%s4] %v46
    %v49 = vld [vmem:[%s0] sm:%s4]
    %50 = vst [vmem:[#allocation0] sm:%s4] %v49
    %v51 = vld [vmem:[#allocation0] sm:$0x7]
    %vm52 = vcmask 80896
    %53 = vst.msk [vmem:[%s1] sm:$0x7] %vm52, %v51
    %s54 = scalar_lea.vmem [#allocation0], 8
    %v55 = vld [vmem:[%s54] sm:$0x7]
    %vm56 = vcmask 80896
    %s57 = scalar_lea.vmem %s1, 3
    %58 = vst.msk [vmem:[%s57] sm:$0x7] %vm56, %v55
    %s59 = scalar_lea.vmem [#allocation0], 16
    %v60 = vld [vmem:[%s59] sm:$0x7]
    %vm61 = vcmask 80896
    %s62 = scalar_lea.vmem %s1, 6
    %63 = vst.msk [vmem:[%s62] sm:$0x7] %vm61, %v60
    %s64 = scalar_lea.vmem [#allocation0], 24
    %v65 = vld [vmem:[%s64] sm:$0x7]
    %vm66 = vcmask 80896
    %s67 = scalar_lea.vmem %s1, 9
    %68 = vst.msk [vmem:[%s67] sm:$0x7] %vm66, %v65
    %s69 = scalar_lea.vmem [#allocation0], 32
    %v70 = vld [vmem:[%s69] sm:$0x7]
    %vm71 = vcmask 80896
    %s72 = scalar_lea.vmem %s1, 12
    %73 = vst.msk [vmem:[%s72] sm:$0x7] %vm71, %v70
    %s74 = scalar_lea.vmem [#allocation0], 40
    %v75 = vld [vmem:[%s74] sm:$0x7]
    %vm76 = vcmask 80896
    %s77 = scalar_lea.vmem %s1, 15
    %78 = vst.msk [vmem:[%s77] sm:$0x7] %vm76, %v75
    %s79 = scalar_lea.vmem [#allocation0], 48
    %v80 = vld [vmem:[%s79] sm:$0x7]
    %vm81 = vcmask 80896
    %s82 = scalar_lea.vmem %s1, 18
    %83 = vst.msk [vmem:[%s82] sm:$0x7] %vm81, %v80
    %s84 = scalar_lea.vmem [#allocation0], 56
    %v85 = vld [vmem:[%s84] sm:$0x7]
    %vm86 = vcmask 80896
    %s87 = scalar_lea.vmem %s1, 21
    %88 = vst.msk [vmem:[%s87] sm:$0x7] %vm86, %v85
    %s89 = scalar_lea.vmem [#allocation0], 64
    %v90 = vld [vmem:[%s89] sm:$0x7]
    %vm91 = vcmask 80896
    %s92 = scalar_lea.vmem %s1, 24
    %93 = vst.msk [vmem:[%s92] sm:$0x7] %vm91, %v90
    %s94 = scalar_lea.vmem [#allocation0], 72
    %v95 = vld [vmem:[%s94] sm:$0x7]
    %vm96 = vcmask 80896
    %s97 = scalar_lea.vmem %s1, 27
    %98 = vst.msk [vmem:[%s97] sm:$0x7] %vm96, %v95

// kernel: covariance_forward.1
$region0: #{covariance_forward.1}
  #allocation0 [shape = 'u32[]', space=smem, size = 0x4, offset = 0x4, fixed_abs, tag = 'smem constant byte address 0x4 - core index']
  #allocation1 [shape = 'u32[144,128]{1,0:T(1,128)}', space=vmem, size = 0x12000, scoped, tag = 'internal scratch']
  %s0 = inlined_call_operand.vmem [shape: f32[90,18], index: 0, kind: input, shape index: {}]
  %s1 = inlined_call_operand.vmem [shape: f32[30,90], index: 1, kind: input, shape index: {}]
  %s2 = inlined_call_operand.vmem [shape: f32[18,18], index: 2, kind: input, shape index: {}]
  %s3 = inlined_call_operand.vmem [shape: f32[30,30], index: 3, kind: output, shape index: {}]
  %s4 = sld [smem:[#allocation0]]
  $region22: #{covariance_forward.1} parent=0
    _
  %s6 = ssub.s32 1, %s4
  %s7 = scalar_select 0, %s6, %s4
  // Predicated region
  $region2: #{covariance_forward.1} parent=0 // pred_check
    _
  $region3: #{covariance_forward.1} parent=0 // pred_check_branch
    %9 = sbr.rel (0) target = $region5
  $region4: #{covariance_forward.1} parent=0 // pred_region
    _
  $region5: #{covariance_forward.1} parent=0 // pred_fallthru
    _
  // Predicated region
  $region6: #{covariance_forward.1} parent=0 // pred_check
    _
  $region7: #{covariance_forward.1} parent=0 // pred_check_branch
    %11 = sbr.rel (0) target = $region9
  $region8: #{covariance_forward.1} parent=0 // pred_region
    _
  $region9: #{covariance_forward.1} parent=0 // pred_fallthru
    _
  // Predicated region
  $region10: #{covariance_forward.1} parent=0 // pred_check
    _
  $region11: #{covariance_forward.1} parent=0 // pred_check_branch
    %13 = sbr.rel (0) target = $region13
  $region12: #{covariance_forward.1} parent=0 // pred_region
    _
  $region13: #{covariance_forward.1} parent=0 // pred_fallthru
    _
  %v14 = vld [vmem:[%s1] sm:$0xff]
  %v15 = vld [vmem:[%s1 + $0x8] sm:$0xff]
  %v16 = vld [vmem:[%s1 + $0x10] sm:$0xff]
  %v17 = vld [vmem:[%s1 + $0x18] sm:$0x3f]
  %v18 = vld [vmem:[%s0] sm:$0xff]
  %v19 = vld [vmem:[%s0 + $0x8] sm:$0xff]
  %v20 = vld [vmem:[%s0 + $0x10] sm:$0xff]
  %v21 = vld [vmem:[%s0 + $0x18] sm:$0xff]
  %v22 = vld [vmem:[%s0 + $0x20] sm:$0xff]
  %v23 = vld [vmem:[%s0 + $0x28] sm:$0xff]
  %v24 = vld [vmem:[%s0 + $0x30] sm:$0xff]
  %v25 = vld [vmem:[%s0 + $0x38] sm:$0xff]
  %v26 = vld [vmem:[%s0 + $0x40] sm:$0xff]
  %v27 = vld [vmem:[%s0 + $0x48] sm:$0xff]
  %v28 = vld [vmem:[%s0 + $0x50] sm:$0xff]
  %v29 = vld [vmem:[%s0 + $0x58] sm:$0x3]
  %vm30 = vcmask 736256
  %v32 = vsel %vm30, %v14, 0
  %v35 = vsel %vm30, %v15, 0
  %v38 = vsel %vm30, %v16, 0
  %v41 = vsel %vm30, %v17, 0
  %vm43 = vcmask 1041408
  %v45 = vsel %vm43, %v29, 0
  %47 = vmatprep.subr.mxu0 0.0
  %48 = vmatpush1.msra.mxu0 0.0
  %49 = vmatprep.subr.mxu0 0.0
  %50 = vmatpush1.msra.mxu0 0.0
  %51 = vmatprep.subr.mxu0 0.0
  %52 = vmatpush1.msra.mxu0 0.0
  %53 = vmatprep.subr.mxu0 0.0
  %54 = vmatpush1.msra.mxu0 0.0
  %55 = vmatprep.subr.mxu0 0.0
  %56 = vmatpush1.msra.mxu0 %v45
  %57 = vmatprep.subr.mxu0 0.0
  %58 = vmatpush1.msra.mxu0 %v28
  %59 = vmatprep.subr.mxu0 0.0
  %60 = vmatpush1.msra.mxu0 %v27
  %61 = vmatprep.subr.mxu0 0.0
  %62 = vmatpush1.msra.mxu0 %v26
  %63 = vmatprep.subr.mxu0 0.0
  %64 = vmatpush1.msra.mxu0 %v25
  %65 = vmatprep.subr.mxu0 0.0
  %66 = vmatpush1.msra.mxu0 %v24
  %67 = vmatprep.subr.mxu0 0.0
  %68 = vmatpush1.msra.mxu0 %v23
  %69 = vmatprep.subr.mxu0 0.0
  %70 = vmatpush1.msra.mxu0 %v22
  %71 = vmatprep.subr.mxu0 0.0
  %72 = vmatpush1.msra.mxu0 %v21
  %73 = vmatprep.subr.mxu0 0.0
  %74 = vmatpush1.msra.mxu0 %v20
  %75 = vmatprep.subr.mxu0 0.0
  %76 = vmatpush1.msra.mxu0 %v19
  %77 = vmatprep.subr.mxu0 0.0
  %78 = vmatpush1.msra.mxu0 %v18
  %79 = vmatprep.subr.mxu0 0.0
  %80 = vmatpush2.msra.mxu0 0.0
  %81 = vmatprep.subr.mxu0 0.0
  %82 = vmatpush2.msra.mxu0 0.0
  %83 = vmatprep.subr.mxu0 0.0
  %84 = vmatpush2.msra.mxu0 0.0
  %85 = vmatprep.subr.mxu0 0.0
  %86 = vmatpush2.msra.mxu0 0.0
  %87 = vmatprep.subr.mxu0 0.0
  %88 = vmatpush2.msra.mxu0 0.0
  %89 = vmatprep.subr.mxu0 0.0
  %90 = vmatpush2.msra.mxu0 0.0
  %91 = vmatprep.subr.mxu0 0.0
  %92 = vmatpush2.msra.mxu0 0.0
  %93 = vmatprep.subr.mxu0 0.0
  %94 = vmatpush2.msra.mxu0 0.0
  %95 = vmatprep.subr.mxu0 0.0
  %96 = vmatpush2.msra.mxu0 0.0
  %97 = vmatprep.subr.mxu0 0.0
  %98 = vmatpush2.msra.mxu0 0.0
  %99 = vmatprep.subr.mxu0 0.0
  %100 = vmatpush2.msra.mxu0 0.0
  %101 = vmatprep.subr.mxu0 0.0
  %102 = vmatpush2.msra.mxu0 0.0
  %103 = vmatprep.subr.mxu0 0.0
  %104 = vmatpush2.msra.mxu0 0.0
  %105 = vmatprep.subr.mxu0 0.0
  %106 = vmatpush2.msra.mxu0 0.0
  %107 = vmatprep.subr.mxu0 0.0
  %108 = vmatpush2.msra.mxu0 0.0
  %109 = vmatprep.subr.mxu0 0.0
  %110 = vmatpush2.msra.mxu0 0.0
  %111 = vmatprep.mubr.f32.mxu0 0.0
  %112 = vmatmul.mubr.f32.gmra.mxu0 %v32
  %v113 = vpop.f32.mrf.mxu0
  %v114 = vadd.f32 0.0, %v113
  %v115 = vpop.f32.mrf.mxu0
  %116 = vmatprep.mubr.f32.mxu0 0.0
  %117 = vmatmul.mubr.f32.gmra.mxu0 %v35
  %v118 = vpop.f32.mrf.mxu0
  %v119 = vadd.f32 0.0, %v118
  %v120 = vpop.f32.mrf.mxu0
  %121 = vmatprep.mubr.f32.mxu0 0.0
  %122 = vmatmul.mubr.f32.gmra.mxu0 %v38
  %v123 = vpop.f32.mrf.mxu0
  %v124 = vadd.f32 0.0, %v123
  %v125 = vpop.f32.mrf.mxu0
  %126 = vmatprep.mubr.f32.mxu0 0.0
  %127 = vmatmul.mubr.f32.gmra.mxu0 %v41
  %v128 = vpop.f32.mrf.mxu0
  %v129 = vadd.f32 0.0, %v128
  %v130 = vpop.f32.mrf.mxu0
  %131 = vdwg.mxu0
  %v132 = vld [vmem:[%s2] sm:$0xff]
  %v133 = vld [vmem:[%s2 + $0x8] sm:$0xff]
  %v134 = vld [vmem:[%s2 + $0x10] sm:$0x3]
  %vm135 = vcmask 146432
  %v137 = vsel %vm135, %v114, 0
  %v140 = vsel %vm135, %v119, 0
  %v143 = vsel %vm135, %v124, 0
  %v146 = vsel %vm135, %v129, 0
  %v149 = vsel %vm43, %v134, 0
  %151 = vmatprep.subr.mxu0 0.0
  %152 = vmatpush1.msra.mxu0 0.0
  %153 = vmatprep.subr.mxu0 0.0
  %154 = vmatpush1.msra.mxu0 0.0
  %155 = vmatprep.subr.mxu0 0.0
  %156 = vmatpush1.msra.mxu0 0.0
  %157 = vmatprep.subr.mxu0 0.0
  %158 = vmatpush1.msra.mxu0 0.0
  %159 = vmatprep.subr.mxu0 0.0
  %160 = vmatpush1.msra.mxu0 0.0
  %161 = vmatprep.subr.mxu0 0.0
  %162 = vmatpush1.msra.mxu0 0.0
  %163 = vmatprep.subr.mxu0 0.0
  %164 = vmatpush1.msra.mxu0 0.0
  %165 = vmatprep.subr.mxu0 0.0
  %166 = vmatpush1.msra.mxu0 0.0
  %167 = vmatprep.subr.mxu0 0.0
  %168 = vmatpush1.msra.mxu0 0.0
  %169 = vmatprep.subr.mxu0 0.0
  %170 = vmatpush1.msra.mxu0 0.0
  %171 = vmatprep.subr.mxu0 0.0
  %172 = vmatpush1.msra.mxu0 0.0
  %173 = vmatprep.subr.mxu0 0.0
  %174 = vmatpush1.msra.mxu0 0.0
  %175 = vmatprep.subr.mxu0 0.0
  %176 = vmatpush1.msra.mxu0 0.0
  %177 = vmatprep.subr.mxu0 0.0
  %178 = vmatpush1.msra.mxu0 %v149
  %179 = vmatprep.subr.mxu0 0.0
  %180 = vmatpush1.msra.mxu0 %v133
  %181 = vmatprep.subr.mxu0 0.0
  %182 = vmatpush1.msra.mxu0 %v132
  %183 = vmatprep.subr.mxu0 0.0
  %184 = vmatpush2.msra.mxu0 0.0
  %185 = vmatprep.subr.mxu0 0.0
  %186 = vmatpush2.msra.mxu0 0.0
  %187 = vmatprep.subr.mxu0 0.0
  %188 = vmatpush2.msra.mxu0 0.0
  %189 = vmatprep.subr.mxu0 0.0
  %190 = vmatpush2.msra.mxu0 0.0
  %191 = vmatprep.subr.mxu0 0.0
  %192 = vmatpush2.msra.mxu0 0.0
  %193 = vmatprep.subr.mxu0 0.0
  %194 = vmatpush2.msra.mxu0 0.0
  %195 = vmatprep.subr.mxu0 0.0
  %196 = vmatpush2.msra.mxu0 0.0
  %197 = vmatprep.subr.mxu0 0.0
  %198 = vmatpush2.msra.mxu0 0.0
  %199 = vmatprep.subr.mxu0 0.0
  %200 = vmatpush2.msra.mxu0 0.0
  %201 = vmatprep.subr.mxu0 0.0
  %202 = vmatpush2.msra.mxu0 0.0
  %203 = vmatprep.subr.mxu0 0.0
  %204 = vmatpush2.msra.mxu0 0.0
  %205 = vmatprep.subr.mxu0 0.0
  %206 = vmatpush2.msra.mxu0 0.0
  %207 = vmatprep.subr.mxu0 0.0
  %208 = vmatpush2.msra.mxu0 0.0
  %209 = vmatprep.subr.mxu0 0.0
  %210 = vmatpush2.msra.mxu0 0.0
  %211 = vmatprep.subr.mxu0 0.0
  %212 = vmatpush2.msra.mxu0 0.0
  %213 = vmatprep.subr.mxu0 0.0
  %214 = vmatpush2.msra.mxu0 0.0
  %215 = vmatprep.mubr.f32.mxu0 0.0
  %216 = vmatmul.mubr.f32.gmra.mxu0 %v137
  %v217 = vpop.f32.mrf.mxu0
  %v218 = vadd.f32 0.0, %v217
  %v219 = vpop.f32.mrf.mxu0
  %220 = vmatprep.mubr.f32.mxu0 0.0
  %221 = vmatmul.mubr.f32.gmra.mxu0 %v140
  %v222 = vpop.f32.mrf.mxu0
  %v223 = vadd.f32 0.0, %v222
  %v224 = vpop.f32.mrf.mxu0
  %225 = vmatprep.mubr.f32.mxu0 0.0
  %226 = vmatmul.mubr.f32.gmra.mxu0 %v143
  %v227 = vpop.f32.mrf.mxu0
  %v228 = vadd.f32 0.0, %v227
  %v229 = vpop.f32.mrf.mxu0
  %230 = vmatprep.mubr.f32.mxu0 0.0
  %231 = vmatmul.mubr.f32.gmra.mxu0 %v146
  %v232 = vpop.f32.mrf.mxu0
  %v233 = vadd.f32 0.0, %v232
  %v234 = vpop.f32.mrf.mxu0
  %235 = vdwg.mxu0
  %v237 = vsel %vm135, %v218, 0
  %v240 = vsel %vm135, %v223, 0
  %v243 = vsel %vm135, %v228, 0
  %v246 = vsel %vm135, %v233, 0
  %248 = vmatprep.subr.mxu0 0.0
  %249 = vmatpush1.xpose.msra.mxu0 0.0
  %250 = vmatprep.subr.mxu0 0.0
  %251 = vmatpush1.xpose.msra.mxu0 0.0
  %252 = vmatprep.subr.mxu0 0.0
  %253 = vmatpush1.xpose.msra.mxu0 0.0
  %254 = vmatprep.subr.mxu0 0.0
  %255 = vmatpush1.xpose.msra.mxu0 0.0
  %256 = vmatprep.subr.mxu0 0.0
  %257 = vmatpush1.xpose.msra.mxu0 0.0
  %258 = vmatprep.subr.mxu0 0.0
  %259 = vmatpush1.xpose.msra.mxu0 0.0
  %260 = vmatprep.subr.mxu0 0.0
  %261 = vmatpush1.xpose.msra.mxu0 0.0
  %262 = vmatprep.subr.mxu0 0.0
  %263 = vmatpush1.xpose.msra.mxu0 0.0
  %264 = vmatprep.subr.mxu0 0.0
  %265 = vmatpush1.xpose.msra.mxu0 0.0
  %266 = vmatprep.subr.mxu0 0.0
  %267 = vmatpush1.xpose.msra.mxu0 0.0
  %268 = vmatprep.subr.mxu0 0.0
  %269 = vmatpush1.xpose.msra.mxu0 0.0
  %270 = vmatprep.subr.mxu0 0.0
  %271 = vmatpush1.xpose.msra.mxu0 0.0
  %272 = vmatprep.subr.mxu0 0.0
  %273 = vmatpush1.xpose.msra.mxu0 %v146
  %274 = vmatprep.subr.mxu0 0.0
  %275 = vmatpush1.xpose.msra.mxu0 %v143
  %276 = vmatprep.subr.mxu0 0.0
  %277 = vmatpush1.xpose.msra.mxu0 %v140
  %278 = vmatprep.subr.mxu0 0.0
  %279 = vmatpush1.xpose.msra.mxu0 %v137
  %280 = vmatprep.subr.mxu0 0.0
  %281 = vmatpush2.xpose.msra.mxu0 0.0
  %282 = vmatprep.subr.mxu0 0.0
  %283 = vmatpush2.xpose.msra.mxu0 0.0
  %284 = vmatprep.subr.mxu0 0.0
  %285 = vmatpush2.xpose.msra.mxu0 0.0
  %286 = vmatprep.subr.mxu0 0.0
  %287 = vmatpush2.xpose.msra.mxu0 0.0
  %288 = vmatprep.subr.mxu0 0.0
  %289 = vmatpush2.xpose.msra.mxu0 0.0
  %290 = vmatprep.subr.mxu0 0.0
  %291 = vmatpush2.xpose.msra.mxu0 0.0
  %292 = vmatprep.subr.mxu0 0.0
  %293 = vmatpush2.xpose.msra.mxu0 0.0
  %294 = vmatprep.subr.mxu0 0.0
  %295 = vmatpush2.xpose.msra.mxu0 0.0
  %296 = vmatprep.subr.mxu0 0.0
  %297 = vmatpush2.xpose.msra.mxu0 0.0
  %298 = vmatprep.subr.mxu0 0.0
  %299 = vmatpush2.xpose.msra.mxu0 0.0
  %300 = vmatprep.subr.mxu0 0.0
  %301 = vmatpush2.xpose.msra.mxu0 0.0
  %302 = vmatprep.subr.mxu0 0.0
  %303 = vmatpush2.xpose.msra.mxu0 0.0
  %304 = vmatprep.subr.mxu0 0.0
  %305 = vmatpush2.xpose.msra.mxu0 0.0
  %306 = vmatprep.subr.mxu0 0.0
  %307 = vmatpush2.xpose.msra.mxu0 0.0
  %308 = vmatprep.subr.mxu0 0.0
  %309 = vmatpush2.xpose.msra.mxu0 0.0
  %310 = vmatprep.subr.mxu0 0.0
  %311 = vmatpush2.xpose.msra.mxu0 0.0
  %312 = vmatprep.mubr.f32.mxu0 0.0
  %313 = vmatmul.mubr.f32.gmra.mxu0 %v237
  %v314 = vpop.f32.mrf.mxu0
  %v315 = vadd.f32 0.0, %v314
  %v316 = vpop.f32.mrf.mxu0
  %317 = vmatprep.mubr.f32.mxu0 0.0
  %318 = vmatmul.mubr.f32.gmra.mxu0 %v240
  %v319 = vpop.f32.mrf.mxu0
  %v320 = vadd.f32 0.0, %v319
  %v321 = vpop.f32.mrf.mxu0
  %322 = vmatprep.mubr.f32.mxu0 0.0
  %323 = vmatmul.mubr.f32.gmra.mxu0 %v243
  %v324 = vpop.f32.mrf.mxu0
  %v325 = vadd.f32 0.0, %v324
  %v326 = vpop.f32.mrf.mxu0
  %327 = vmatprep.mubr.f32.mxu0 0.0
  %328 = vmatmul.mubr.f32.gmra.mxu0 %v246
  %v329 = vpop.f32.mrf.mxu0
  %v330 = vadd.f32 0.0, %v329
  %v331 = vpop.f32.mrf.mxu0
  %332 = vdwg.mxu0
  %vm333 = vcmask 244736
  %334 = vst.msk [vmem:[%s3] sm:$0xff] %vm333, %v315
  %335 = vst.msk [vmem:[%s3 + $0x8] sm:$0xff] %vm333, %v320
  %336 = vst.msk [vmem:[%s3 + $0x10] sm:$0xff] %vm333, %v325
  %vm337 = vcmask 242688
  %338 = vst.msk [vmem:[%s3 + $0x18] sm:$0x3f] %vm337, %v330
  // Predicated region
  $region14: #{covariance_forward.1} parent=0 // pred_check
    _
  $region15: #{covariance_forward.1} parent=0 // pred_check_branch
    %340 = sbr.rel (0) target = $region17
  $region16: #{covariance_forward.1} parent=0 // pred_region
    _
  $region17: #{covariance_forward.1} parent=0 // pred_fallthru
    _
  // Predicated region
  $region18: #{covariance_forward.1} parent=0 // pred_check
    _
  $region19: #{covariance_forward.1} parent=0 // pred_check_branch
    %342 = sbr.rel (0) target = $region21
  $region20: #{covariance_forward.1} parent=0 // pred_region
    _
  $region21: #{covariance_forward.1} parent=0 // pred_fallthru
    _

</llo_original>
